<compile_context>
chip_gen: v5e
topology: v5e:2x2
jax: 0.10.0
libtpu: 0.0.40
codegen_flags: <defaults>
</compile_context>

<pallas_src>
import math

import jax
import jax.numpy as jnp
from jax.experimental import pallas as pl
from jax.experimental.pallas import tpu as pltpu


# --------------------------- hardware-aware sizing -------------------------- #
def _vmem_capacity_bytes() -> int:
    try:
        cap = int(pltpu.get_tpu_info().vmem_capacity_bytes)
        if cap > 0:
            return cap
    except Exception:
        pass
    return 64 * 1024 * 1024  # conservative default: v7x per-TensorCore VMEM


def _vmem_limit_bytes() -> int:
    # 3/4 of physical VMEM: 96 MiB on v5e/v6e (128 MiB physical), 48 MiB on
    # v7x (64 MiB physical).  Default scoped VMEM is only 16-32 MiB, so this
    # is also passed explicitly to keep big double-buffered tiles pipelined.
    return (_vmem_capacity_bytes() * 3) // 4


def _sublane_multiple(itemsize: int) -> int:
    # f32 -> 8, bf16 -> 16, int8/fp8 -> 32 (sub-32-bit dtypes pack sublanes)
    return 8 * max(1, 4 // max(1, itemsize))


def _block_budget_bytes(itemsize: int, f32_intermediates: bool) -> int:
    """VMEM budget for one input-sized block.

    Resident bytes per block ~= 4x block (input + output, each double-buffered
    at the native dtype) plus, for the softmax kernels, ~2 f32-sized
    intermediates (upcast x and exp(x - m)); 1.25x headroom covers on-chip
    relayout copies and spill slack.
    """
    factor = 4.0
    if f32_intermediates:
        factor += 2.0 * (4.0 / max(1, itemsize))
    factor *= 1.25
    return max(256 * 1024, int(_vmem_limit_bytes() / factor))


def _row_tile(R: int, C: int, itemsize: int, f32_intermediates: bool) -> int:
    """Largest valid row tile for a (R, C) array under the VMEM budget."""
    sub = _sublane_multiple(itemsize)
    row_bytes = max(1, C * itemsize)
    budget = _block_budget_bytes(itemsize, f32_intermediates)
    if min(R, sub) * row_bytes > budget:
        # TODO(synk): rows too wide for one VMEM block need an online
        # (running-max/sum) softmax over a second 'arbitrary' grid axis.
        raise NotImplementedError(
            f"row of {C} elements ({row_bytes} B) exceeds the per-block VMEM "
            f"budget ({budget} B; limit {_vmem_limit_bytes()} B) on this TPU")
    if R <= sub:
        return R  # single block equal to the full row extent (valid BlockSpec)
    tm = max(sub, (budget // row_bytes) // sub * sub)
    # Target >= 4 grid steps (>= 2 per TensorCore on v7x megacore) when there
    # is enough work, >= 2 otherwise, so pipelining + core sharding kick in.
    target = 4 if R > 4 * sub else 2
    per_step = pl.cdiv(pl.cdiv(R, target), sub) * sub
    tm = min(tm, max(sub, per_step))
    r_up = pl.cdiv(R, sub) * sub
    return min(tm, r_up)


def _row_pack_factor(R: int, C: int) -> int:
    """Smallest k with (k*C) % 128 == 0 and R % k == 0 (1 if impossible)."""
    if C % 128 == 0:
        return 1
    k = 128 // math.gcd(C, 128)
    if k > 1 and R % k == 0:
        return k
    return 1


# ------------------------------ Pallas kernels ------------------------------ #
def _make_lane_softmax_kernel(groups: int, group_size: int):
    """Softmax over contiguous lane groups of a (TM, groups*group_size) block.

    groups == 1 is the plain last-axis softmax; groups > 1 means `groups`
    original rows were packed into one lane-dense HBM row and the reduction is
    done per group after an on-chip reshape (stays in VMEM, XLU relayout).
    """
    def kernel(x_ref, o_ref):
        x = x_ref[...].astype(jnp.float32)
        tm = x.shape[0]
        if groups > 1:
            x = x.reshape(tm, groups, group_size)
        m = jnp.max(x, axis=-1, keepdims=True)
        e = jnp.exp(x - m)
        s = jnp.sum(e, axis=-1, keepdims=True)
        # exact reciprocal: approx=True (EUP vrcp) would miss the 1e-5 check
        y = e * pl.reciprocal(s, approx=False)
        if groups > 1:
            y = y.reshape(tm, groups * group_size)
        o_ref[...] = y.astype(o_ref.dtype)

    return kernel


def _make_mid_softmax_kernel(d2: int, d1: int):
    """Softmax over the middle axis of (TB, d2, d1), fed as a flat (TB, d2*d1)
    lane-dense block (no HBM transpose, no lane-sparse small-d1 DMAs)."""
    def kernel(x_ref, o_ref):
        x = x_ref[...].astype(jnp.float32)
        tb = x.shape[0]
        x = x.reshape(tb, d2, d1)
        m = jnp.max(x, axis=1, keepdims=True)
        e = jnp.exp(x - m)
        s = jnp.sum(e, axis=1, keepdims=True)
        y = (e * pl.reciprocal(s, approx=False)).reshape(tb, d2 * d1)
        o_ref[...] = y.astype(o_ref.dtype)

    return kernel


def _softmax_sublane_kernel(x_ref, o_ref):
    # softmax over axis=-2 of a (TB, D2, T) block; used when T % 128 == 0 so
    # the direct 3D layout is already lane-dense and needs no relayout.
    x = x_ref[...].astype(jnp.float32)
    m = jnp.max(x, axis=-2, keepdims=True)
    e = jnp.exp(x - m)
    s = jnp.sum(e, axis=-2, keepdims=True)
    o_ref[...] = (e * pl.reciprocal(s, approx=False)).astype(o_ref.dtype)


def _abs_kernel(x_ref, o_ref):
    o_ref[...] = jnp.abs(x_ref[...])


# ------------------------------- kernel runners ------------------------------ #
def _run_rowwise(kernel, x2d, *, f32_intermediates=False):
    """Run `kernel` over a (R, C) array tiled along rows (ragged tail masked)."""
    R, C = x2d.shape
    tm = _row_tile(R, C, x2d.dtype.itemsize, f32_intermediates)
    return pl.pallas_call(
        kernel,
        out_shape=jax.ShapeDtypeStruct((R, C), x2d.dtype),
        grid_spec=pltpu.PrefetchScalarGridSpec(
            num_scalar_prefetch=0,
            grid=(pl.cdiv(R, tm),),
            in_specs=[pl.BlockSpec((tm, C), lambda i: (i, 0))],
            out_specs=pl.BlockSpec((tm, C), lambda i: (i, 0)),
        ),
        compiler_params=pltpu.CompilerParams(
            dimension_semantics=("parallel",),
            vmem_limit_bytes=_vmem_limit_bytes(),
        ),
    )(x2d)


def _run_batched_3d(kernel, x3d, *, f32_intermediates=True):
    """Run `kernel` over (B, D2, T) tiled along the batch axis (T % 128 == 0)."""
    B, D2, T = x3d.shape
    itemsize = x3d.dtype.itemsize
    per_elem = max(1, D2 * T * itemsize)
    budget = _block_budget_bytes(itemsize, f32_intermediates)
    if per_elem > budget:
        # TODO(synk): online softmax over a second grid axis for huge slices.
        raise NotImplementedError(
            f"one (D2={D2}, T={T}) slice ({per_elem} B) exceeds the per-block "
            f"VMEM budget ({budget} B) on this TPU")
    tb = max(1, budget // per_elem)
    target = 4 if B >= 4 else (2 if B >= 2 else 1)  # >=2 steps/core on v7x
    tb = min(tb, max(1, pl.cdiv(B, target)), B)
    return pl.pallas_call(
        kernel,
        out_shape=jax.ShapeDtypeStruct((B, D2, T), x3d.dtype),
        grid_spec=pltpu.PrefetchScalarGridSpec(
            num_scalar_prefetch=0,
            grid=(pl.cdiv(B, tb),),
            in_specs=[pl.BlockSpec((tb, D2, T), lambda i: (i, 0, 0))],
            out_specs=pl.BlockSpec((tb, D2, T), lambda i: (i, 0, 0)),
        ),
        compiler_params=pltpu.CompilerParams(
            dimension_semantics=("parallel",),
            vmem_limit_bytes=_vmem_limit_bytes(),
        ),
    )(x3d)


def _run_elementwise(kernel, x):
    """Elementwise op on a lane-dense slab; no padding / extra HBM copies."""
    if x.size == 0:
        return x
    orig_shape = x.shape
    n = x.size
    # Prefer a flat (R, W) slab with W % 128 == 0 and >= 8 rows (full vregs).
    chosen = None
    for w in (2048, 1024, 512, 256, 128):
        if n % w == 0:
            if chosen is None:
                chosen = w
            if n // w >= 8:
                chosen = w
                break
    if chosen is not None:
        return _run_rowwise(kernel, x.reshape(-1, chosen)).reshape(orig_shape)
    # Ragged total size: keep the natural trailing dim (no jnp.pad round trip),
    # packing rows when that makes the lane axis a multiple of 128.
    x2d = x.reshape(-1, orig_shape[-1]) if x.ndim >= 2 else x.reshape(1, -1)
    R, C = x2d.shape
    k = _row_pack_factor(R, C)
    if k > 1:
        x2d = x2d.reshape(R // k, k * C)
    return _run_rowwise(kernel, x2d).reshape(orig_shape)


# ------------------------------ softmax dispatch ----------------------------- #
def _softmax_last_axis(x):
    shape = x.shape
    C = shape[-1]
    R = x.size // C
    x2d = x.reshape(R, C)
    k = _row_pack_factor(R, C)
    if k > 1:
        # lane-dense packed path: k original rows per 128-lane-multiple HBM row
        try:
            y = _run_rowwise(_make_lane_softmax_kernel(k, C),
                             x2d.reshape(R // k, k * C), f32_intermediates=True)
            return y.reshape(shape)
        except Exception:
            pass  # fall back to the direct (correct, lane-sparse) layout
    y = _run_rowwise(_make_lane_softmax_kernel(1, C), x2d, f32_intermediates=True)
    return y.reshape(shape)


def _softmax_general_axis(x, dim):
    # Contiguous, metadata-only reshape to (B, D2, T) — no HBM transpose — for
    # any reduction axis that is not the last one.
    shape = x.shape
    D2 = shape[dim]
    T = 1
    for s in shape[dim + 1:]:
        T *= int(s)
    B = x.size // (D2 * T)
    if T % 128 != 0:
        # lane-dense flat slab + on-chip reshape (avoids 16/128-lane DMAs)
        try:
            y = _run_rowwise(_make_mid_softmax_kernel(D2, T),
                             x.reshape(B, D2 * T), f32_intermediates=True)
            return y.reshape(shape)
        except Exception:
            pass  # fall back to the direct 3D layout below
    y = _run_batched_3d(_softmax_sublane_kernel, x.reshape(B, D2, T))
    return y.reshape(shape)


# ------------------------------- Lambda module ------------------------------- #
class Lambda:
    """JAX/Pallas port of delu.nn.Lambda.

    Only "functions from torch" are allowed; here they are named by string and
    dispatched to Pallas kernels (or pure shape glue where no compute exists).
    """

    _SUPPORTED = ("softmax", "abs", "squeeze")

    def __init__(self, fn_name: str, **kwargs) -> None:
        if fn_name not in self._SUPPORTED:
            # TODO(synk): generic dispatch to arbitrary torch functions /
            # Tensor methods has no Pallas equivalent; only a fixed allow-list
            # is implemented.
            raise ValueError(
                f"fn must be one of {self._SUPPORTED}, got {fn_name!r}")

        def is_valid_value(v):
            return (
                v is None
                or isinstance(v, (bool, int, float, bytes, str))
                or (isinstance(v, tuple) and all(map(is_valid_value, v)))
            )

        for k, v in kwargs.items():
            if not is_valid_value(v):
                raise ValueError(
                    "For kwargs, the allowed value types include: None, bool, "
                    "int, float, bytes, str and (nested) tuples of these "
                    f"simple types. This is not true for argument {k} with "
                    f"value {v}")
        self._function = fn_name
        self._function_kwargs = kwargs

    def __call__(self, x: jnp.ndarray) -> jnp.ndarray:
        fn = self._function
        kw = self._function_kwargs

        if fn == "squeeze":
            # pure shape glue, no compute -> plain JAX
            if "dim" in kw:
                if x.ndim == 0:
                    return x
                d = kw["dim"] % x.ndim
                return jnp.squeeze(x, axis=d) if x.shape[d] == 1 else x
            return jnp.squeeze(x)

        if fn == "abs":
            return _run_elementwise(_abs_kernel, x)

        if fn == "softmax":
            if x.ndim == 0:
                return jnp.ones_like(x)
            if x.size == 0:
                return x
            dim = kw.get("dim", -1) % x.ndim
            if dim == x.ndim - 1:
                return _softmax_last_axis(x)
            return _softmax_general_axis(x, dim)

        raise AssertionError("unreachable")


# ----------------------------------- main ----------------------------------- #
if __name__ == "__main__":
    key = jax.random.PRNGKey(0)
    # NCHW-style input, small shapes
    x = jax.random.normal(key, (2, 4, 16, 16), dtype=jnp.float32)

    # Lambda(torch.softmax, dim=-1) -> lane-dense packed last-axis softmax
    y = jax.block_until_ready(Lambda("softmax", dim=-1)(x))
    assert y.shape == x.shape and y.dtype == x.dtype
    assert jnp.allclose(y, jax.nn.softmax(x, axis=-1), atol=1e-5, rtol=1e-5)

    # Lambda(torch.softmax, dim=2) -> flat lane-dense slab, no HBM transpose
    y2 = jax.block_until_ready(Lambda("softmax", dim=2)(x))
    assert jnp.allclose(y2, jax.nn.softmax(x, axis=2), atol=1e-5, rtol=1e-5)

    # Lambda(torch.softmax, dim=1) -> contiguous reshape + direct sublane kernel
    y1 = jax.block_until_ready(Lambda("softmax", dim=1)(x))
    assert jnp.allclose(y1, jax.nn.softmax(x, axis=1), atol=1e-5, rtol=1e-5)

    # Lambda(torch.softmax, dim=-1) with a 128-multiple last dim (direct path)
    xw = jax.random.normal(jax.random.PRNGKey(2), (4, 8, 256), dtype=jnp.float32)
    yw = jax.block_until_ready(Lambda("softmax", dim=-1)(xw))
    assert jnp.allclose(yw, jax.nn.softmax(xw, axis=-1), atol=1e-5, rtol=1e-5)

    # Lambda(torch.abs) -> lane-dense elementwise kernel
    ya = jax.block_until_ready(Lambda("abs")(x))
    assert ya.shape == x.shape and jnp.allclose(ya, jnp.abs(x))

    # Lambda(torch.abs) on a ragged-size array (size not a multiple of 128)
    xr = jax.random.normal(jax.random.PRNGKey(3), (3, 5, 7), dtype=jnp.float32)
    yr = jax.block_until_ready(Lambda("abs")(xr))
    assert jnp.allclose(yr, jnp.abs(xr))

    # Lambda(torch.squeeze, dim=1) / Lambda(torch.squeeze) — shape-only
    xs = jax.random.normal(jax.random.PRNGKey(1), (2, 1, 3, 1), dtype=jnp.float32)
    assert Lambda("squeeze", dim=1)(xs).shape == (2, 3, 1)
    assert Lambda("squeeze")(xs).shape == (2, 3)

    print("KERNEL_OK")
</pallas_src>

<mosaic_0001>
module attributes {stable_mosaic.version = 11 : i64} {
  func.func @kernel(%arg0: i32, %arg1: memref<8x128xf32, #tpu.memory_space<vmem>>, %arg2: memref<8x128xf32, #tpu.memory_space<vmem>>) attributes {dimension_semantics = [#tpu.dimension_semantics<parallel>], iteration_bounds = array<i64: 2>, scalar_prefetch = 0 : i64, scratch_operands = 0 : i64, tpu.core_type = #tpu.core_type<tc>, window_params = [{transform_indices = @transform_0, window_bounds = array<i64: 8, 128>}, {transform_indices = @transform_1, window_bounds = array<i64: 8, 128>}]} {
    %c0 = arith.constant 0 : index
    %c0_0 = arith.constant 0 : index
    %0 = vector.load %arg1[%c0, %c0_0] : memref<8x128xf32, #tpu.memory_space<vmem>>, vector<8x128xf32>
    %1 = vector.shape_cast %0 : vector<8x128xf32> to vector<8x8x16xf32>
    %cst = arith.constant dense<0xFF800000> : vector<8x8xf32>
    %2 = vector.multi_reduction <maximumf>, %1, %cst [2] : vector<8x8x16xf32> to vector<8x8xf32>
    %3 = vector.shape_cast %2 : vector<8x8xf32> to vector<8x8x1xf32>
    %4 = vector.broadcast %3 : vector<8x8x1xf32> to vector<8x8x16xf32>
    %5 = arith.subf %1, %4 : vector<8x8x16xf32>
    %6 = math.exp %5 : vector<8x8x16xf32>
    %cst_1 = arith.constant dense<0.000000e+00> : vector<8x8xf32>
    %7 = vector.multi_reduction <add>, %6, %cst_1 [2] : vector<8x8x16xf32> to vector<8x8xf32>
    %8 = vector.shape_cast %7 : vector<8x8xf32> to vector<8x8x1xf32>
    %9 = tpu.reciprocal %8 : vector<8x8x1xf32> -> vector<8x8x1xf32>
    %10 = vector.broadcast %9 : vector<8x8x1xf32> to vector<8x8x16xf32>
    %11 = arith.mulf %6, %10 : vector<8x8x16xf32>
    %12 = vector.shape_cast %11 : vector<8x8x16xf32> to vector<8x128xf32>
    %c0_2 = arith.constant 0 : index
    %c0_3 = arith.constant 0 : index
    %13 = vector.load %arg2[%c0_2, %c0_3] : memref<8x128xf32, #tpu.memory_space<vmem>>, vector<8x128xf32>
    tpu.vector_store %arg2[%c0_2, %c0_3], %12 {strides = array<i32>} : memref<8x128xf32, #tpu.memory_space<vmem>>, vector<8x128xf32>,
    return
  }
  func.func @transform_0(%arg0: i32) -> (i32, i32) {
    %c0_i32 = arith.constant 0 : i32
    %c0_i32_0 = arith.constant 0 : i32
    return %arg0, %c0_i32 : i32, i32
  }
  func.func @transform_1(%arg0: i32) -> (i32, i32) {
    %c0_i32 = arith.constant 0 : i32
    %c0_i32_0 = arith.constant 0 : i32
    return %arg0, %c0_i32 : i32, i32
  }
}

module attributes {stable_mosaic.version = 11 : i64} {
  func.func @kernel(%arg0: i32, %arg1: memref<32x16xf32, #tpu.memory_space<vmem>>, %arg2: memref<32x16xf32, #tpu.memory_space<vmem>>) attributes {dimension_semantics = [#tpu.dimension_semantics<parallel>], iteration_bounds = array<i64: 4>, scalar_prefetch = 0 : i64, scratch_operands = 0 : i64, tpu.core_type = #tpu.core_type<tc>, window_params = [{transform_indices = @transform_0, window_bounds = array<i64: 32, 16>}, {transform_indices = @transform_1, window_bounds = array<i64: 32, 16>}]} {
    %c0 = arith.constant 0 : index
    %c0_0 = arith.constant 0 : index
    %0 = vector.load %arg1[%c0, %c0_0] : memref<32x16xf32, #tpu.memory_space<vmem>>, vector<32x16xf32>
    %cst = arith.constant dense<0xFF800000> : vector<32xf32>
    %1 = vector.multi_reduction <maximumf>, %0, %cst [1] : vector<32x16xf32> to vector<32xf32>
    %2 = vector.shape_cast %1 : vector<32xf32> to vector<32x1xf32>
    %3 = vector.broadcast %2 : vector<32x1xf32> to vector<32x16xf32>
    %4 = arith.subf %0, %3 : vector<32x16xf32>
    %5 = math.exp %4 : vector<32x16xf32>
    %cst_1 = arith.constant dense<0.000000e+00> : vector<32xf32>
    %6 = vector.multi_reduction <add>, %5, %cst_1 [1] : vector<32x16xf32> to vector<32xf32>
    %7 = vector.shape_cast %6 : vector<32xf32> to vector<32x1xf32>
    %8 = tpu.reciprocal %7 : vector<32x1xf32> -> vector<32x1xf32>
    %9 = vector.broadcast %8 : vector<32x1xf32> to vector<32x16xf32>
    %10 = arith.mulf %5, %9 : vector<32x16xf32>
    %c0_2 = arith.constant 0 : index
    %c0_3 = arith.constant 0 : index
    %11 = vector.load %arg2[%c0_2, %c0_3] : memref<32x16xf32, #tpu.memory_space<vmem>>, vector<32x16xf32>
    tpu.vector_store %arg2[%c0_2, %c0_3], %10 {strides = array<i32>} : memref<32x16xf32, #tpu.memory_space<vmem>>, vector<32x16xf32>,
    return
  }
  func.func @transform_0(%arg0: i32) -> (i32, i32) {
    %c0_i32 = arith.constant 0 : i32
    %c0_i32_0 = arith.constant 0 : i32
    return %arg0, %c0_i32 : i32, i32
  }
  func.func @transform_1(%arg0: i32) -> (i32, i32) {
    %c0_i32 = arith.constant 0 : i32
    %c0_i32_0 = arith.constant 0 : i32
    return %arg0, %c0_i32 : i32, i32
  }
}

</mosaic_0001>

<llo_original>
// kernel: tpu_custom_call.1
$region0: #{tpu_custom_call.1}
  #allocation0 [shape = 'u32[]', space=smem, size = 0x4, offset = 0x4, fixed_abs, tag = 'smem constant byte address 0x4 - core index']
  #allocation1 [shape = 'u32[72,128]{1,0:T(1,128)}', space=vmem, size = 0x9000, scoped, tag = 'internal scratch']
  %s0 = inlined_call_operand.hbm [shape: f32[16,128], index: 0, kind: input, shape index: {}]
  %s1 = inlined_call_operand.hbm [shape: f32[16,128], index: 1, kind: output, shape index: {}]
  %s2 = sld [smem:[#allocation0]]
  $region41: #{tpu_custom_call.1} parent=0
    _
  %s4 = ssub.s32 1, %s2
  %s5 = scalar_select 0, %s4, %s2
  $region1: #{tpu_custom_call.1} parent=0
    #allocation2 [shape = 'u8[8192]{0}', space=vmem, size = 0x2000, scoped, tag = 'input window, operand 0']
    #allocation3 [shape = 's32[2]{0}', space=sflag, size = 0x8, scoped, tag = 'scoped memory for tpu_custom_call.1']
    #allocation4 [shape = 's32[2]{0}', space=sflag, size = 0x8, scoped, tag = 'scoped memory for tpu_custom_call.1']
    #allocation5 [shape = 'u8[8192]{0}', space=vmem, size = 0x2000, scoped, tag = 'output window, operand 0']
    %6 = vsyncpa [#allocation3], 0
    %s7 = scalar_lea.sflag [#allocation3], 1
    %8 = vsyncpa %s7, 0
    %9 = vsyncpa [#allocation4], 0
    %s10 = scalar_lea.sflag [#allocation4], 1
    %11 = vsyncpa %s10, 0
    loop: start=0, step=1, limit=4
    $region2: #{tpu_custom_call.1} parent=1 // loop_pre_header
      _
    $region3: #{tpu_custom_call.1} parent=1 // loop_header
      %s13 = sphi 0, %s17
      %p14 = scmp.ge.s32.totalorder %s13, 4
      %s23 = sphi 0, %s25
      %s26 = sphi 0, %s23
      %s27 = sphi 0, %s26
      %s43 = sphi 0, %s27
      %s49 = sphi 0, %s51
      %s52 = sphi 0, %s49
      %s53 = sphi 0, %s52
      %s69 = sphi 0, %s53
    $region4: #{tpu_custom_call.1} parent=1 // loop_header_branch
      %16 = sbr.rel (%p14) target = $region8
    $region5: #{tpu_custom_call.1} parent=1 // loop_body
      %s18 = ssub.s32 %s13, 1
      %s19 = ssub.s32 %s13, 2
      %s20 = sadd.s32 %s13, 1
      %s21 = ssub.s32 %s13, %s20
      %p22 = scmp.eq.s32.totalorder %s21, 0
      %s24 = sadd.s32 %s23, 1
      %s25 = scalar_select %p22, %s23, %s24
      %p28 = pneg %p22
      %p29 = scmp.eq.s32.totalorder %s13, 1
      %p30 = por %p28, %p29
      %p31 = scmp.ne.s32.totalorder %s23, %s26
      %p32 = scmp.eq.s32.totalorder %s13, 0
      %p33 = por %p31, %p32
      %p34 = scmp.ne.s32.totalorder %s23, %s26
      %p35 = scmp.eq.s32.totalorder %s18, 1
      %p36 = por %p34, %p35
      %p37 = scmp.ne.s32.totalorder %s26, %s27
      %p38 = scmp.eq.s32.totalorder %s18, 0
      %p39 = por %p37, %p38
      %p40 = scmp.ne.s32.totalorder %s26, %s27
      %p41 = scmp.eq.s32.totalorder %s19, 1
      %p42 = por %p40, %p41
      %p44 = scmp.ne.s32.totalorder %s27, %s43
      %p45 = scmp.eq.s32.totalorder %s19, 0
      %p46 = por %p44, %p45
      %s47 = ssub.s32 %s13, %s20
      %p48 = scmp.eq.s32.totalorder %s47, 0
      %s50 = sadd.s32 %s49, 1
      %s51 = scalar_select %p48, %s49, %s50
      %p54 = pneg %p48
      %p55 = scmp.eq.s32.totalorder %s13, 1
      %p56 = por %p54, %p55
      %p57 = scmp.ne.s32.totalorder %s49, %s52
      %p58 = scmp.eq.s32.totalorder %s13, 0
      %p59 = por %p57, %p58
      %p60 = scmp.ne.s32.totalorder %s49, %s52
      %p61 = scmp.eq.s32.totalorder %s18, 1
      %p62 = por %p60, %p61
      %p63 = scmp.ne.s32.totalorder %s52, %s53
      %p64 = scmp.eq.s32.totalorder %s18, 0
      %p65 = por %p63, %p64
      %p66 = scmp.ne.s32.totalorder %s52, %s53
      %p67 = scmp.eq.s32.totalorder %s19, 1
      %p68 = por %p66, %p67
      %p70 = scmp.ne.s32.totalorder %s53, %s69
      %p71 = scmp.eq.s32.totalorder %s19, 0
      %p72 = por %p70, %p71
      %p73 = scmp.le.s32.totalorder 1, %s13
      %p74 = scmp.lt.s32.totalorder %s13, 3
      %p75 = pnand %p73, %p74
      %p76 = pneg %p75
      // Predicated region
      $region9: #{tpu_custom_call.1} parent=5 // pred_check
        _
      $region10: #{tpu_custom_call.1} parent=5 // pred_check_branch
        %78 = sbr.rel (%p75) target = $region12
      $region11: #{tpu_custom_call.1} parent=5 // pred_region
        %s79 = ssub.s32 %s13, 1
      $region12: #{tpu_custom_call.1} parent=5 // pred_fallthru
        _
      %p80 = scmp.lt.s32.totalorder %s13, 2
      // Predicated region
      $region13: #{tpu_custom_call.1} parent=5 // pred_check
        %p81 = pneg %p80
      $region14: #{tpu_custom_call.1} parent=5 // pred_check_branch
        %83 = sbr.rel (%p81) target = $region16
      $region15: #{tpu_custom_call.1} parent=5 // pred_region
        // Predicated region
        $region17: #{tpu_custom_call.1} parent=15 // pred_check
          %p84 = pneg %p33
        $region18: #{tpu_custom_call.1} parent=15 // pred_check_branch
          %86 = sbr.rel (%p84) target = $region20
        $region19: #{tpu_custom_call.1} parent=15 // pred_region
          %s87 = sand.u32 %s23, 1
          %s88 = scalar_lea.sflag [#allocation3], %s87
          %s89 = sand.u32 %s23, 1
          %s90 = smul.addr %s89, 8
          %s91 = scalar_lea.vmem [#allocation2], %s90
          %93 = vsyncadd %s88, 0
          %s94 = smul.addr %s13, 8
          %s95 = scalar_lea.hbm %s0, %s94
          %s97 = sshll.u32 %s95, 4
          %s98 = int_to_ptr.hbm [resolvable:$true] %s97
          %s99 = sshll.u32 %s91, 4
          %s100 = int_to_ptr.vmem [resolvable:$true] %s99
          %102 = dma.hbm_to_vmem [thread:$0]  %s98, 128, %s100, %s88
        $region20: #{tpu_custom_call.1} parent=15 // pred_fallthru
          _
      $region16: #{tpu_custom_call.1} parent=5 // pred_fallthru
        _
      %p103 = scmp.le.s32.totalorder 1, %s13
      %p104 = scmp.lt.s32.totalorder %s13, 3
      %p105 = pnand %p103, %p104
      %p106 = pneg %p105
      // Predicated region
      $region21: #{tpu_custom_call.1} parent=5 // pred_check
        _
      $region22: #{tpu_custom_call.1} parent=5 // pred_check_branch
        %108 = sbr.rel (%p105) target = $region24
      $region23: #{tpu_custom_call.1} parent=5 // pred_region
        %s109 = ssub.s32 %s13, 1
        %s110 = sand.u32 %s26, 1
        %s111 = scalar_lea.sflag [#allocation3], %s110
        %s112 = sand.u32 %s26, 1
        %s113 = smul.addr %s112, 8
        %s114 = scalar_lea.vmem [#allocation2], %s113
        // Predicated region
        $region25: #{tpu_custom_call.1} parent=23 // pred_check
          %p115 = pneg %p39
        $region26: #{tpu_custom_call.1} parent=23 // pred_check_branch
          %117 = sbr.rel (%p115) target = $region28
        $region27: #{tpu_custom_call.1} parent=23 // pred_region
          %119 = dma.done %s111, 128
        $region28: #{tpu_custom_call.1} parent=23 // pred_fallthru
          _
        %s120 = sand.u32 %s26, 1
        %s121 = scalar_lea.sflag [#allocation3], %s120
        %s122 = sand.u32 %s26, 1
        %s123 = smul.addr %s122, 8
        %s124 = scalar_lea.vmem [#allocation2], %s123
        %p125 = pneg %p39
        %p126 = pneg %p36
        %p127 = pneg %p65
        %p128 = pneg %p62
        %s129 = sand.u32 %s52, 1
        %s130 = scalar_lea.sflag [#allocation4], %s129
        %s131 = sand.u32 %s52, 1
        %s132 = smul.addr %s131, 8
        %s133 = scalar_lea.vmem [#allocation5], %s132
        %v134 = vld [vmem:[%s114] sm:$0xff]
        %136 = vrot.lane.b32.xlu0 %v134, 112
        %v137 = vpop.permute.xlu0 %136
        %139 = vrot.lane.b32.xlu0 %v134, 96
        %v140 = vpop.permute.xlu0 %139
        %142 = vrot.lane.b32.xlu0 %v134, 80
        %v143 = vpop.permute.xlu0 %142
        %145 = vrot.lane.b32.xlu0 %v134, 64
        %v146 = vpop.permute.xlu0 %145
        %148 = vrot.lane.b32.xlu0 %v134, 48
        %v149 = vpop.permute.xlu0 %148
        %151 = vrot.lane.b32.xlu0 %v134, 32
        %v152 = vpop.permute.xlu0 %151
        %154 = vrot.lane.b32.xlu0 %v134, 16
        %v155 = vpop.permute.xlu0 %154
        %v157 = vrot.slane %v140, 4
        %vm158 = vcmask 1047556
        %v159 = vsel %vm158, %v157, %v134
        %v160 = vrot.slane %v134, 4
        %v161 = vsel %vm158, %v140, %v160
        %v163 = vunpack.c.l.s4 1983009808
        %v164 = vunpack.c.0.s8 %v163
        %v165 = vperm.slane %v159, %v164
        %v167 = vunpack.c.l.s4 1983009808
        %v168 = vunpack.c.0.s8 %v167
        %v169 = vperm.slane %v161, %v168
        %v170 = vrot.slane %v143, 4
        %v171 = vsel %vm158, %v170, %v137
        %v172 = vrot.slane %v137, 4
        %v173 = vsel %vm158, %v143, %v172
        %v175 = vunpack.c.l.s4 1983009808
        %v176 = vunpack.c.0.s8 %v175
        %v177 = vperm.slane %v171, %v176
        %v179 = vunpack.c.l.s4 1983009808
        %v180 = vunpack.c.0.s8 %v179
        %v181 = vperm.slane %v173, %v180
        %v182 = vrot.slane %v152, 4
        %v183 = vsel %vm158, %v182, %v146
        %v184 = vrot.slane %v146, 4
        %v185 = vsel %vm158, %v152, %v184
        %v187 = vunpack.c.l.s4 1983009808
        %v188 = vunpack.c.0.s8 %v187
        %v189 = vperm.slane %v183, %v188
        %v191 = vunpack.c.l.s4 1983009808
        %v192 = vunpack.c.0.s8 %v191
        %v193 = vperm.slane %v185, %v192
        %v194 = vrot.slane %v155, 4
        %v195 = vsel %vm158, %v194, %v149
        %v196 = vrot.slane %v149, 4
        %v197 = vsel %vm158, %v155, %v196
        %v199 = vunpack.c.l.s4 1983009808
        %v200 = vunpack.c.0.s8 %v199
        %v201 = vperm.slane %v195, %v200
        %v203 = vunpack.c.l.s4 1983009808
        %v204 = vunpack.c.0.s8 %v203
        %v205 = vperm.slane %v197, %v204
        %v206 = vrot.slane %v177, 4
        %v207 = vsel %vm158, %v206, %v165
        %v208 = vrot.slane %v165, 4
        %v209 = vsel %vm158, %v177, %v208
        %v211 = vunpack.c.l.s4 1934713408
        %v212 = vunpack.c.0.s8 %v211
        %v213 = vperm.slane %v207, %v212
        %v215 = vunpack.c.l.s4 1934713408
        %v216 = vunpack.c.0.s8 %v215
        %v217 = vperm.slane %v209, %v216
        %v218 = vrot.slane %v181, 4
        %v219 = vsel %vm158, %v218, %v169
        %v220 = vrot.slane %v169, 4
        %v221 = vsel %vm158, %v181, %v220
        %v223 = vunpack.c.l.s4 1934713408
        %v224 = vunpack.c.0.s8 %v223
        %v225 = vperm.slane %v219, %v224
        %v227 = vunpack.c.l.s4 1934713408
        %v228 = vunpack.c.0.s8 %v227
        %v229 = vperm.slane %v221, %v228
        %v230 = vrot.slane %v201, 4
        %v231 = vsel %vm158, %v230, %v189
        %v232 = vrot.slane %v189, 4
        %v233 = vsel %vm158, %v201, %v232
        %v235 = vunpack.c.l.s4 1934713408
        %v236 = vunpack.c.0.s8 %v235
        %v237 = vperm.slane %v231, %v236
        %v239 = vunpack.c.l.s4 1934713408
        %v240 = vunpack.c.0.s8 %v239
        %v241 = vperm.slane %v233, %v240
        %v242 = vrot.slane %v205, 4
        %v243 = vsel %vm158, %v242, %v193
        %v244 = vrot.slane %v193, 4
        %v245 = vsel %vm158, %v205, %v244
        %v247 = vunpack.c.l.s4 1934713408
        %v248 = vunpack.c.0.s8 %v247
        %v249 = vperm.slane %v243, %v248
        %v251 = vunpack.c.l.s4 1934713408
        %v252 = vunpack.c.0.s8 %v251
        %v253 = vperm.slane %v245, %v252
        %v254 = vrot.slane %v237, 4
        %v255 = vsel %vm158, %v254, %v213
        %v256 = vrot.slane %v213, 4
        %v257 = vsel %vm158, %v237, %v256
        %v258 = vrot.slane %v241, 4
        %v259 = vsel %vm158, %v258, %v217
        %v260 = vrot.slane %v217, 4
        %v261 = vsel %vm158, %v241, %v260
        %v262 = vrot.slane %v249, 4
        %v263 = vsel %vm158, %v262, %v225
        %v264 = vrot.slane %v225, 4
        %v265 = vsel %vm158, %v249, %v264
        %v266 = vrot.slane %v253, 4
        %v267 = vsel %vm158, %v266, %v229
        %v268 = vrot.slane %v229, 4
        %v269 = vsel %vm158, %v253, %v268
        %vm270 = vcmask 130048
        %v271 = vsel %vm270, %v255, -inf
        %272 = vmax.xlane.f32.xlu0 %v271
        %v273 = vpop.xlane.xlu0 %272
        %v274 = vsel %vm270, %v257, -inf
        %275 = vmax.xlane.f32.xlu0 %v274
        %v276 = vpop.xlane.xlu0 %275
        %v277 = vsel %vm270, %v259, -inf
        %278 = vmax.xlane.f32.xlu0 %v277
        %v279 = vpop.xlane.xlu0 %278
        %v280 = vsel %vm270, %v261, -inf
        %281 = vmax.xlane.f32.xlu0 %v280
        %v282 = vpop.xlane.xlu0 %281
        %v283 = vsel %vm270, %v263, -inf
        %284 = vmax.xlane.f32.xlu0 %v283
        %v285 = vpop.xlane.xlu0 %284
        %v286 = vsel %vm270, %v265, -inf
        %287 = vmax.xlane.f32.xlu0 %v286
        %v288 = vpop.xlane.xlu0 %287
        %v289 = vsel %vm270, %v267, -inf
        %290 = vmax.xlane.f32.xlu0 %v289
        %v291 = vpop.xlane.xlu0 %290
        %v292 = vsel %vm270, %v269, -inf
        %293 = vmax.xlane.f32.xlu0 %v292
        %v294 = vpop.xlane.xlu0 %293
        %v295 = vsub.f32 %v255, %v273
        %v296 = vsub.f32 %v257, %v276
        %v297 = vsub.f32 %v259, %v279
        %v298 = vsub.f32 %v261, %v282
        %v299 = vsub.f32 %v263, %v285
        %v300 = vsub.f32 %v265, %v288
        %v301 = vsub.f32 %v267, %v291
        %v302 = vsub.f32 %v269, %v294
        %v303 = vmul.f32 %v295, 1.442695
        %v304 = vpow.pop %v303
        %v305 = vmul.f32 %v296, 1.442695
        %v306 = vpow.pop %v305
        %v307 = vmul.f32 %v297, 1.442695
        %v308 = vpow.pop %v307
        %v309 = vmul.f32 %v298, 1.442695
        %v310 = vpow.pop %v309
        %v311 = vmul.f32 %v299, 1.442695
        %v312 = vpow.pop %v311
        %v313 = vmul.f32 %v300, 1.442695
        %v314 = vpow.pop %v313
        %v315 = vmul.f32 %v301, 1.442695
        %v316 = vpow.pop %v315
        %v317 = vmul.f32 %v302, 1.442695
        %v318 = vpow.pop %v317
        %v319 = vsel %vm270, %v304, 0.0
        %320 = vadd.xlane.f32.xlu0 %v319
        %v321 = vpop.xlane.xlu0 %320
        %v322 = vsel %vm270, %v306, 0.0
        %323 = vadd.xlane.f32.xlu0 %v322
        %v324 = vpop.xlane.xlu0 %323
        %v325 = vsel %vm270, %v308, 0.0
        %326 = vadd.xlane.f32.xlu0 %v325
        %v327 = vpop.xlane.xlu0 %326
        %v328 = vsel %vm270, %v310, 0.0
        %329 = vadd.xlane.f32.xlu0 %v328
        %v330 = vpop.xlane.xlu0 %329
        %v331 = vsel %vm270, %v312, 0.0
        %332 = vadd.xlane.f32.xlu0 %v331
        %v333 = vpop.xlane.xlu0 %332
        %v334 = vsel %vm270, %v314, 0.0
        %335 = vadd.xlane.f32.xlu0 %v334
        %v336 = vpop.xlane.xlu0 %335
        %v337 = vsel %vm270, %v316, 0.0
        %338 = vadd.xlane.f32.xlu0 %v337
        %v339 = vpop.xlane.xlu0 %338
        %v340 = vsel %vm270, %v318, 0.0
        %341 = vadd.xlane.f32.xlu0 %v340
        %v342 = vpop.xlane.xlu0 %341
        %v343 = vrcp.pop %v321
        %v344 = vmul.f32 %v321, %v343
        %v345 = vsub.f32 1.0, %v344
        %v346 = vmul.f32 %v343, %v345
        %v347 = vadd.f32 %v343, %v346
        %vm348 = vweird.f32 %v321
        %vm349 = vweird.f32 %v343
        %vm350 = vmor %vm348, %vm349
        %v351 = vsel %vm350, %v343, %v347
        %v352 = vand.u32 2147483647, %v321
        %vm353 = vcmp.eq.f32.partialorder %v352, 8.507059e+37
        %v354 = vand.u32 %v321, 2147483648
        %v355 = vor.u32 1.1754944e-38, %v354
        %v356 = vsel %vm353, %v355, %v351
        %v357 = vrcp.pop %v324
        %v358 = vmul.f32 %v324, %v357
        %v359 = vsub.f32 1.0, %v358
        %v360 = vmul.f32 %v357, %v359
        %v361 = vadd.f32 %v357, %v360
        %vm362 = vweird.f32 %v324
        %vm363 = vweird.f32 %v357
        %vm364 = vmor %vm362, %vm363
        %v365 = vsel %vm364, %v357, %v361
        %v366 = vand.u32 2147483647, %v324
        %vm367 = vcmp.eq.f32.partialorder %v366, 8.507059e+37
        %v368 = vand.u32 %v324, 2147483648
        %v369 = vor.u32 1.1754944e-38, %v368
        %v370 = vsel %vm367, %v369, %v365
        %v371 = vrcp.pop %v327
        %v372 = vmul.f32 %v327, %v371
        %v373 = vsub.f32 1.0, %v372
        %v374 = vmul.f32 %v371, %v373
        %v375 = vadd.f32 %v371, %v374
        %vm376 = vweird.f32 %v327
        %vm377 = vweird.f32 %v371
        %vm378 = vmor %vm376, %vm377
        %v379 = vsel %vm378, %v371, %v375
        %v380 = vand.u32 2147483647, %v327
        %vm381 = vcmp.eq.f32.partialorder %v380, 8.507059e+37
        %v382 = vand.u32 %v327, 2147483648
        %v383 = vor.u32 1.1754944e-38, %v382
        %v384 = vsel %vm381, %v383, %v379
        %v385 = vrcp.pop %v330
        %v386 = vmul.f32 %v330, %v385
        %v387 = vsub.f32 1.0, %v386
        %v388 = vmul.f32 %v385, %v387
        %v389 = vadd.f32 %v385, %v388
        %vm390 = vweird.f32 %v330
        %vm391 = vweird.f32 %v385
        %vm392 = vmor %vm390, %vm391
        %v393 = vsel %vm392, %v385, %v389
        %v394 = vand.u32 2147483647, %v330
        %vm395 = vcmp.eq.f32.partialorder %v394, 8.507059e+37
        %v396 = vand.u32 %v330, 2147483648
        %v397 = vor.u32 1.1754944e-38, %v396
        %v398 = vsel %vm395, %v397, %v393
        %v399 = vrcp.pop %v333
        %v400 = vmul.f32 %v333, %v399
        %v401 = vsub.f32 1.0, %v400
        %v402 = vmul.f32 %v399, %v401
        %v403 = vadd.f32 %v399, %v402
        %vm404 = vweird.f32 %v333
        %vm405 = vweird.f32 %v399
        %vm406 = vmor %vm404, %vm405
        %v407 = vsel %vm406, %v399, %v403
        %v408 = vand.u32 2147483647, %v333
        %vm409 = vcmp.eq.f32.partialorder %v408, 8.507059e+37
        %v410 = vand.u32 %v333, 2147483648
        %v411 = vor.u32 1.1754944e-38, %v410
        %v412 = vsel %vm409, %v411, %v407
        %v413 = vrcp.pop %v336
        %v414 = vmul.f32 %v336, %v413
        %v415 = vsub.f32 1.0, %v414
        %v416 = vmul.f32 %v413, %v415
        %v417 = vadd.f32 %v413, %v416
        %vm418 = vweird.f32 %v336
        %vm419 = vweird.f32 %v413
        %vm420 = vmor %vm418, %vm419
        %v421 = vsel %vm420, %v413, %v417
        %v422 = vand.u32 2147483647, %v336
        %vm423 = vcmp.eq.f32.partialorder %v422, 8.507059e+37
        %v424 = vand.u32 %v336, 2147483648
        %v425 = vor.u32 1.1754944e-38, %v424
        %v426 = vsel %vm423, %v425, %v421
        %v427 = vrcp.pop %v339
        %v428 = vmul.f32 %v339, %v427
        %v429 = vsub.f32 1.0, %v428
        %v430 = vmul.f32 %v427, %v429
        %v431 = vadd.f32 %v427, %v430
        %vm432 = vweird.f32 %v339
        %vm433 = vweird.f32 %v427
        %vm434 = vmor %vm432, %vm433
        %v435 = vsel %vm434, %v427, %v431
        %v436 = vand.u32 2147483647, %v339
        %vm437 = vcmp.eq.f32.partialorder %v436, 8.507059e+37
        %v438 = vand.u32 %v339, 2147483648
        %v439 = vor.u32 1.1754944e-38, %v438
        %v440 = vsel %vm437, %v439, %v435
        %v441 = vrcp.pop %v342
        %v442 = vmul.f32 %v342, %v441
        %v443 = vsub.f32 1.0, %v442
        %v444 = vmul.f32 %v441, %v443
        %v445 = vadd.f32 %v441, %v444
        %vm446 = vweird.f32 %v342
        %vm447 = vweird.f32 %v441
        %vm448 = vmor %vm446, %vm447
        %v449 = vsel %vm448, %v441, %v445
        %v450 = vand.u32 2147483647, %v342
        %vm451 = vcmp.eq.f32.partialorder %v450, 8.507059e+37
        %v452 = vand.u32 %v342, 2147483648
        %v453 = vor.u32 1.1754944e-38, %v452
        %v454 = vsel %vm451, %v453, %v449
        %v455 = vmul.f32 %v304, %v356
        %v456 = vmul.f32 %v306, %v370
        %v457 = vmul.f32 %v308, %v384
        %v458 = vmul.f32 %v310, %v398
        %v459 = vmul.f32 %v312, %v412
        %v460 = vmul.f32 %v314, %v426
        %v461 = vmul.f32 %v316, %v440
        %v462 = vmul.f32 %v318, %v454
        %v463 = vrot.slane %v457, 4
        %v464 = vsel %vm158, %v463, %v455
        %v465 = vrot.slane %v455, 4
        %v466 = vsel %vm158, %v457, %v465
        %v468 = vunpack.c.l.s4 1983009808
        %v469 = vunpack.c.0.s8 %v468
        %v470 = vperm.slane %v464, %v469
        %v472 = vunpack.c.l.s4 1983009808
        %v473 = vunpack.c.0.s8 %v472
        %v474 = vperm.slane %v466, %v473
        %v475 = vrot.slane %v458, 4
        %v476 = vsel %vm158, %v475, %v456
        %v477 = vrot.slane %v456, 4
        %v478 = vsel %vm158, %v458, %v477
        %v480 = vunpack.c.l.s4 1983009808
        %v481 = vunpack.c.0.s8 %v480
        %v482 = vperm.slane %v476, %v481
        %v484 = vunpack.c.l.s4 1983009808
        %v485 = vunpack.c.0.s8 %v484
        %v486 = vperm.slane %v478, %v485
        %v487 = vrot.slane %v461, 4
        %v488 = vsel %vm158, %v487, %v459
        %v489 = vrot.slane %v459, 4
        %v490 = vsel %vm158, %v461, %v489
        %v492 = vunpack.c.l.s4 1983009808
        %v493 = vunpack.c.0.s8 %v492
        %v494 = vperm.slane %v488, %v493
        %v496 = vunpack.c.l.s4 1983009808
        %v497 = vunpack.c.0.s8 %v496
        %v498 = vperm.slane %v490, %v497
        %v499 = vrot.slane %v462, 4
        %v500 = vsel %vm158, %v499, %v460
        %v501 = vrot.slane %v460, 4
        %v502 = vsel %vm158, %v462, %v501
        %v504 = vunpack.c.l.s4 1983009808
        %v505 = vunpack.c.0.s8 %v504
        %v506 = vperm.slane %v500, %v505
        %v508 = vunpack.c.l.s4 1983009808
        %v509 = vunpack.c.0.s8 %v508
        %v510 = vperm.slane %v502, %v509
        %v511 = vrot.slane %v482, 4
        %v512 = vsel %vm158, %v511, %v470
        %v513 = vrot.slane %v470, 4
        %v514 = vsel %vm158, %v482, %v513
        %v516 = vunpack.c.l.s4 1934713408
        %v517 = vunpack.c.0.s8 %v516
        %v518 = vperm.slane %v512, %v517
        %v520 = vunpack.c.l.s4 1934713408
        %v521 = vunpack.c.0.s8 %v520
        %v522 = vperm.slane %v514, %v521
        %v523 = vrot.slane %v486, 4
        %v524 = vsel %vm158, %v523, %v474
        %v525 = vrot.slane %v474, 4
        %v526 = vsel %vm158, %v486, %v525
        %v528 = vunpack.c.l.s4 1934713408
        %v529 = vunpack.c.0.s8 %v528
        %v530 = vperm.slane %v524, %v529
        %v532 = vunpack.c.l.s4 1934713408
        %v533 = vunpack.c.0.s8 %v532
        %v534 = vperm.slane %v526, %v533
        %v535 = vrot.slane %v506, 4
        %v536 = vsel %vm158, %v535, %v494
        %v537 = vrot.slane %v494, 4
        %v538 = vsel %vm158, %v506, %v537
        %v540 = vunpack.c.l.s4 1934713408
        %v541 = vunpack.c.0.s8 %v540
        %v542 = vperm.slane %v536, %v541
        %v544 = vunpack.c.l.s4 1934713408
        %v545 = vunpack.c.0.s8 %v544
        %v546 = vperm.slane %v538, %v545
        %v547 = vrot.slane %v510, 4
        %v548 = vsel %vm158, %v547, %v498
        %v549 = vrot.slane %v498, 4
        %v550 = vsel %vm158, %v510, %v549
        %v552 = vunpack.c.l.s4 1934713408
        %v553 = vunpack.c.0.s8 %v552
        %v554 = vperm.slane %v548, %v553
        %v556 = vunpack.c.l.s4 1934713408
        %v557 = vunpack.c.0.s8 %v556
        %v558 = vperm.slane %v550, %v557
        %v559 = vrot.slane %v542, 4
        %v560 = vsel %vm158, %v559, %v518
        %v561 = vrot.slane %v518, 4
        %v562 = vsel %vm158, %v542, %v561
        %v563 = vrot.slane %v546, 4
        %v564 = vsel %vm158, %v563, %v522
        %v565 = vrot.slane %v522, 4
        %v566 = vsel %vm158, %v546, %v565
        %v567 = vrot.slane %v554, 4
        %v568 = vsel %vm158, %v567, %v530
        %v569 = vrot.slane %v530, 4
        %v570 = vsel %vm158, %v554, %v569
        %v571 = vrot.slane %v558, 4
        %v572 = vsel %vm158, %v571, %v534
        %v573 = vrot.slane %v534, 4
        %v574 = vsel %vm158, %v558, %v573
        %576 = vrot.lane.b32.xlu0 %v562, 16
        %v577 = vpop.permute.xlu0 %576
        %580 = vrot.lane.b32.xlu0 %v564, 32
        %v581 = vpop.permute.xlu0 %580
        %584 = vrot.lane.b32.xlu0 %v566, 48
        %v585 = vpop.permute.xlu0 %584
        %588 = vrot.lane.b32.xlu0 %v568, 64
        %v589 = vpop.permute.xlu0 %588
        %592 = vrot.lane.b32.xlu0 %v570, 80
        %v593 = vpop.permute.xlu0 %592
        %596 = vrot.lane.b32.xlu0 %v572, 96
        %v597 = vpop.permute.xlu0 %596
        %600 = vrot.lane.b32.xlu0 %v574, 112
        %v601 = vpop.permute.xlu0 %600
        %v603 = vsel %vm270, %v560, %v577
        %vm604 = vcmask 261120
        %v605 = vsel %vm604, %v603, %v581
        %vm606 = vcmask 392192
        %v607 = vsel %vm606, %v605, %v585
        %vm608 = vcmask 523264
        %v609 = vsel %vm608, %v607, %v589
        %vm610 = vcmask 654336
        %v611 = vsel %vm610, %v609, %v593
        %vm612 = vcmask 785408
        %v613 = vsel %vm612, %v611, %v597
        %vm614 = vcmask 916480
        %v615 = vsel %vm614, %v613, %v601
        %616 = vst [vmem:[%s133] sm:$0xff] %v615
        %s617 = sand.u32 %s52, 1
        %s618 = scalar_lea.sflag [#allocation4], %s617
        %s619 = sand.u32 %s52, 1
        %s620 = smul.addr %s619, 8
        %s621 = scalar_lea.vmem [#allocation5], %s620
        // Predicated region
        $region29: #{tpu_custom_call.1} parent=23 // pred_check
          %p622 = pneg %p62
        $region30: #{tpu_custom_call.1} parent=23 // pred_check_branch
          %624 = sbr.rel (%p622) target = $region32
        $region31: #{tpu_custom_call.1} parent=23 // pred_region
          %626 = vsyncadd %s618, 0
          %s627 = smul.addr %s18, 8
          %s628 = scalar_lea.hbm %s1, %s627
          %s630 = sshll.u32 %s621, 4
          %s631 = int_to_ptr.vmem [resolvable:$true] %s630
          %s632 = sshll.u32 %s628, 4
          %s633 = int_to_ptr.hbm [resolvable:$true] %s632
          %635 = dma.vmem_to_hbm [thread:$0]  %s631, 128, %s633, %s618
        $region32: #{tpu_custom_call.1} parent=23 // pred_fallthru
          _
      $region24: #{tpu_custom_call.1} parent=5 // pred_fallthru
        _
      %p636 = scmp.le.s32.totalorder 2, %s13
      // Predicated region
      $region33: #{tpu_custom_call.1} parent=5 // pred_check
        %p637 = pneg %p636
      $region34: #{tpu_custom_call.1} parent=5 // pred_check_branch
        %639 = sbr.rel (%p637) target = $region36
      $region35: #{tpu_custom_call.1} parent=5 // pred_region
        %s640 = ssub.s32 %s13, 2
        // Predicated region
        $region37: #{tpu_custom_call.1} parent=35 // pred_check
          %p641 = pneg %p68
        $region38: #{tpu_custom_call.1} parent=35 // pred_check_branch
          %643 = sbr.rel (%p641) target = $region40
        $region39: #{tpu_custom_call.1} parent=35 // pred_region
          %s644 = sand.u32 %s53, 1
          %s645 = scalar_lea.sflag [#allocation4], %s644
          %s646 = sand.u32 %s53, 1
          %s647 = smul.addr %s646, 8
          %s648 = scalar_lea.vmem [#allocation5], %s647
          %650 = dma.done %s645, 128
        $region40: #{tpu_custom_call.1} parent=35 // pred_fallthru
          _
      $region36: #{tpu_custom_call.1} parent=5 // pred_fallthru
        _
    $region6: #{tpu_custom_call.1} parent=1 // loop_footer
      %s17 = sadd.s32 1, %s13
    $region7: #{tpu_custom_call.1} parent=1 // loop_footer_branch
      %12 = sbr.rel target = $region3
    $region8: #{tpu_custom_call.1} parent=1 // loop_exit
      _
    %651 = vsyncpa [#allocation3], 1
    %s652 = scalar_lea.sflag [#allocation3], 1
    %653 = vsyncpa %s652, 1
    %654 = vsyncpa [#allocation4], 1
    %s655 = scalar_lea.sflag [#allocation4], 1
    %656 = vsyncpa %s655, 1

// kernel: tpu_custom_call.1
$region0: #{tpu_custom_call.1}
  #allocation0 [shape = 'u32[]', space=smem, size = 0x4, offset = 0x4, fixed_abs, tag = 'smem constant byte address 0x4 - core index']
  #allocation1 [shape = 'u32[72,128]{1,0:T(1,128)}', space=vmem, size = 0x9000, scoped, tag = 'internal scratch']
  %s0 = inlined_call_operand.vmem [shape: f32[128,16], index: 0, kind: input, shape index: {}]
  %s1 = inlined_call_operand.vmem [shape: f32[128,16], index: 1, kind: output, shape index: {}]
  %s2 = sld [smem:[#allocation0]]
  $region37: #{tpu_custom_call.1} parent=0
    _
  %s4 = ssub.s32 1, %s2
  %s5 = scalar_select 0, %s4, %s2
  loop: start=0, step=1, limit=6
  $region2: #{tpu_custom_call.1} parent=0 // loop_pre_header
    _
  $region3: #{tpu_custom_call.1} parent=0 // loop_header
    %s7 = sphi 0, %s11
    %p8 = scmp.ge.s32.totalorder %s7, 6
    %s17 = sphi 0, %s19
    %s20 = sphi 0, %s17
    %s21 = sphi 0, %s20
    %s37 = sphi 0, %s21
    %s43 = sphi 0, %s45
    %s46 = sphi 0, %s43
    %s47 = sphi 0, %s46
    %s63 = sphi 0, %s47
  $region4: #{tpu_custom_call.1} parent=0 // loop_header_branch
    %10 = sbr.rel (%p8) target = $region8
  $region5: #{tpu_custom_call.1} parent=0 // loop_body
    %s12 = ssub.s32 %s7, 1
    %s13 = ssub.s32 %s7, 2
    %s14 = sadd.s32 %s7, 1
    %s15 = ssub.s32 %s7, %s14
    %p16 = scmp.eq.s32.totalorder %s15, 0
    %s18 = sadd.s32 %s17, 1
    %s19 = scalar_select %p16, %s17, %s18
    %p22 = pneg %p16
    %p23 = scmp.eq.s32.totalorder %s7, 3
    %p24 = por %p22, %p23
    %p25 = scmp.ne.s32.totalorder %s17, %s20
    %p26 = scmp.eq.s32.totalorder %s7, 0
    %p27 = por %p25, %p26
    %p28 = scmp.ne.s32.totalorder %s17, %s20
    %p29 = scmp.eq.s32.totalorder %s12, 3
    %p30 = por %p28, %p29
    %p31 = scmp.ne.s32.totalorder %s20, %s21
    %p32 = scmp.eq.s32.totalorder %s12, 0
    %p33 = por %p31, %p32
    %p34 = scmp.ne.s32.totalorder %s20, %s21
    %p35 = scmp.eq.s32.totalorder %s13, 3
    %p36 = por %p34, %p35
    %p38 = scmp.ne.s32.totalorder %s21, %s37
    %p39 = scmp.eq.s32.totalorder %s13, 0
    %p40 = por %p38, %p39
    %s41 = ssub.s32 %s7, %s14
    %p42 = scmp.eq.s32.totalorder %s41, 0
    %s44 = sadd.s32 %s43, 1
    %s45 = scalar_select %p42, %s43, %s44
    %p48 = pneg %p42
    %p49 = scmp.eq.s32.totalorder %s7, 3
    %p50 = por %p48, %p49
    %p51 = scmp.ne.s32.totalorder %s43, %s46
    %p52 = scmp.eq.s32.totalorder %s7, 0
    %p53 = por %p51, %p52
    %p54 = scmp.ne.s32.totalorder %s43, %s46
    %p55 = scmp.eq.s32.totalorder %s12, 3
    %p56 = por %p54, %p55
    %p57 = scmp.ne.s32.totalorder %s46, %s47
    %p58 = scmp.eq.s32.totalorder %s12, 0
    %p59 = por %p57, %p58
    %p60 = scmp.ne.s32.totalorder %s46, %s47
    %p61 = scmp.eq.s32.totalorder %s13, 3
    %p62 = por %p60, %p61
    %p64 = scmp.ne.s32.totalorder %s47, %s63
    %p65 = scmp.eq.s32.totalorder %s13, 0
    %p66 = por %p64, %p65
    %p67 = scmp.le.s32.totalorder 1, %s7
    %p68 = scmp.lt.s32.totalorder %s7, 5
    %p69 = pnand %p67, %p68
    %p70 = pneg %p69
    // Predicated region
    $region9: #{tpu_custom_call.1} parent=5 // pred_check
      _
    $region10: #{tpu_custom_call.1} parent=5 // pred_check_branch
      %72 = sbr.rel (%p69) target = $region12
    $region11: #{tpu_custom_call.1} parent=5 // pred_region
      %s73 = ssub.s32 %s7, 1
    $region12: #{tpu_custom_call.1} parent=5 // pred_fallthru
      _
    %p74 = scmp.lt.s32.totalorder %s7, 4
    // Predicated region
    $region13: #{tpu_custom_call.1} parent=5 // pred_check
      %p75 = pneg %p74
    $region14: #{tpu_custom_call.1} parent=5 // pred_check_branch
      %77 = sbr.rel (%p75) target = $region16
    $region15: #{tpu_custom_call.1} parent=5 // pred_region
      // Predicated region
      $region17: #{tpu_custom_call.1} parent=15 // pred_check
        %p78 = pneg %p27
      $region18: #{tpu_custom_call.1} parent=15 // pred_check_branch
        %80 = sbr.rel (%p78) target = $region20
      $region19: #{tpu_custom_call.1} parent=15 // pred_region
        %s81 = smul.u32 4, %s7
        %p82 = scmp.lt.s32.totalorder %s81, 15
        %s83 = scalar_select %p82, %s81, 15
        %s84 = smul.addr %s83, 8
        %s85 = scalar_lea.vmem %s0, %s84
        %s86 = smul.u32 4, %s7
      $region20: #{tpu_custom_call.1} parent=15 // pred_fallthru
        _
    $region16: #{tpu_custom_call.1} parent=5 // pred_fallthru
      _
    %p87 = scmp.le.s32.totalorder 1, %s7
    %p88 = scmp.lt.s32.totalorder %s7, 5
    %p89 = pnand %p87, %p88
    %p90 = pneg %p89
    // Predicated region
    $region21: #{tpu_custom_call.1} parent=5 // pred_check
      _
    $region22: #{tpu_custom_call.1} parent=5 // pred_check_branch
      %92 = sbr.rel (%p89) target = $region24
    $region23: #{tpu_custom_call.1} parent=5 // pred_region
      %s93 = ssub.s32 %s7, 1
      %s94 = smul.u32 4, %s12
      %p95 = scmp.lt.s32.totalorder %s94, 15
      %s96 = scalar_select %p95, %s94, 15
      %s97 = smul.addr %s96, 8
      %s98 = scalar_lea.vmem %s0, %s97
      %p99 = pneg %p33
      %p100 = pneg %p30
      %p101 = pneg %p59
      %p102 = pneg %p56
      %s103 = smul.u32 4, %s12
      %p104 = scmp.lt.s32.totalorder %s103, 15
      %s105 = scalar_select %p104, %s103, 15
      %s106 = smul.addr %s105, 8
      %s107 = scalar_lea.vmem %s1, %s106
      %s108 = smul.u32 4, %s12
      %p109 = scmp.lt.s32.totalorder %s108, 15
      %s110 = scalar_select %p109, %s108, 15
      %s111 = smul.addr %s110, 8
      %s112 = scalar_lea.vmem %s0, %s111
      %s113 = smul.u32 4, %s12
      %s114 = smul.u32 4, %s12
      %p115 = scmp.lt.s32.totalorder %s114, 15
      %s116 = scalar_select %p115, %s114, 15
      %s117 = smul.addr %s116, 8
      %s118 = scalar_lea.vmem %s1, %s117
      %s119 = smul.u32 4, %s12
      %v120 = vld [vmem:[%s112] sm:$0xff]
      %v121 = vld [vmem:[%s112 + $0x8] sm:$0xff]
      %v122 = vld [vmem:[%s112 + $0x10] sm:$0xff]
      %v123 = vld [vmem:[%s112 + $0x18] sm:$0xff]
      %vm124 = vcmask 130048
      %v125 = vsel %vm124, %v120, -inf
      %126 = vmax.xlane.f32.xlu0 %v125
      %v127 = vpop.xlane.xlu0 %126
      %v128 = vsel %vm124, %v121, -inf
      %129 = vmax.xlane.f32.xlu0 %v128
      %v130 = vpop.xlane.xlu0 %129
      %v131 = vsel %vm124, %v122, -inf
      %132 = vmax.xlane.f32.xlu0 %v131
      %v133 = vpop.xlane.xlu0 %132
      %v134 = vsel %vm124, %v123, -inf
      %135 = vmax.xlane.f32.xlu0 %v134
      %v136 = vpop.xlane.xlu0 %135
      %v137 = vsub.f32 %v120, %v127
      %v138 = vsub.f32 %v121, %v130
      %v139 = vsub.f32 %v122, %v133
      %v140 = vsub.f32 %v123, %v136
      %v141 = vmul.f32 %v137, 1.442695
      %v142 = vpow.pop %v141
      %v143 = vmul.f32 %v138, 1.442695
      %v144 = vpow.pop %v143
      %v145 = vmul.f32 %v139, 1.442695
      %v146 = vpow.pop %v145
      %v147 = vmul.f32 %v140, 1.442695
      %v148 = vpow.pop %v147
      %v149 = vsel %vm124, %v142, 0.0
      %150 = vadd.xlane.f32.xlu0 %v149
      %v151 = vpop.xlane.xlu0 %150
      %v152 = vsel %vm124, %v144, 0.0
      %153 = vadd.xlane.f32.xlu0 %v152
      %v154 = vpop.xlane.xlu0 %153
      %v155 = vsel %vm124, %v146, 0.0
      %156 = vadd.xlane.f32.xlu0 %v155
      %v157 = vpop.xlane.xlu0 %156
      %v158 = vsel %vm124, %v148, 0.0
      %159 = vadd.xlane.f32.xlu0 %v158
      %v160 = vpop.xlane.xlu0 %159
      %v161 = vrcp.pop %v151
      %v162 = vmul.f32 %v151, %v161
      %v163 = vsub.f32 1.0, %v162
      %v164 = vmul.f32 %v161, %v163
      %v165 = vadd.f32 %v161, %v164
      %vm166 = vweird.f32 %v151
      %vm167 = vweird.f32 %v161
      %vm168 = vmor %vm166, %vm167
      %v169 = vsel %vm168, %v161, %v165
      %v170 = vand.u32 2147483647, %v151
      %vm171 = vcmp.eq.f32.partialorder %v170, 8.507059e+37
      %v172 = vand.u32 %v151, 2147483648
      %v173 = vor.u32 1.1754944e-38, %v172
      %v174 = vsel %vm171, %v173, %v169
      %v175 = vrcp.pop %v154
      %v176 = vmul.f32 %v154, %v175
      %v177 = vsub.f32 1.0, %v176
      %v178 = vmul.f32 %v175, %v177
      %v179 = vadd.f32 %v175, %v178
      %vm180 = vweird.f32 %v154
      %vm181 = vweird.f32 %v175
      %vm182 = vmor %vm180, %vm181
      %v183 = vsel %vm182, %v175, %v179
      %v184 = vand.u32 2147483647, %v154
      %vm185 = vcmp.eq.f32.partialorder %v184, 8.507059e+37
      %v186 = vand.u32 %v154, 2147483648
      %v187 = vor.u32 1.1754944e-38, %v186
      %v188 = vsel %vm185, %v187, %v183
      %v189 = vrcp.pop %v157
      %v190 = vmul.f32 %v157, %v189
      %v191 = vsub.f32 1.0, %v190
      %v192 = vmul.f32 %v189, %v191
      %v193 = vadd.f32 %v189, %v192
      %vm194 = vweird.f32 %v157
      %vm195 = vweird.f32 %v189
      %vm196 = vmor %vm194, %vm195
      %v197 = vsel %vm196, %v189, %v193
      %v198 = vand.u32 2147483647, %v157
      %vm199 = vcmp.eq.f32.partialorder %v198, 8.507059e+37
      %v200 = vand.u32 %v157, 2147483648
      %v201 = vor.u32 1.1754944e-38, %v200
      %v202 = vsel %vm199, %v201, %v197
      %v203 = vrcp.pop %v160
      %v204 = vmul.f32 %v160, %v203
      %v205 = vsub.f32 1.0, %v204
      %v206 = vmul.f32 %v203, %v205
      %v207 = vadd.f32 %v203, %v206
      %vm208 = vweird.f32 %v160
      %vm209 = vweird.f32 %v203
      %vm210 = vmor %vm208, %vm209
      %v211 = vsel %vm210, %v203, %v207
      %v212 = vand.u32 2147483647, %v160
      %vm213 = vcmp.eq.f32.partialorder %v212, 8.507059e+37
      %v214 = vand.u32 %v160, 2147483648
      %v215 = vor.u32 1.1754944e-38, %v214
      %v216 = vsel %vm213, %v215, %v211
      %v217 = vmul.f32 %v142, %v174
      %v218 = vmul.f32 %v144, %v188
      %v219 = vmul.f32 %v146, %v202
      %v220 = vmul.f32 %v148, %v216
      %221 = vst.msk [vmem:[%s118] sm:$0xff] %vm124, %v217
      %222 = vst.msk [vmem:[%s118 + $0x8] sm:$0xff] %vm124, %v218
      %223 = vst.msk [vmem:[%s118 + $0x10] sm:$0xff] %vm124, %v219
      %224 = vst.msk [vmem:[%s118 + $0x18] sm:$0xff] %vm124, %v220
      %s225 = smul.u32 4, %s12
      %p226 = scmp.lt.s32.totalorder %s225, 15
      %s227 = scalar_select %p226, %s225, 15
      %s228 = smul.addr %s227, 8
      %s229 = scalar_lea.vmem %s1, %s228
      // Predicated region
      $region25: #{tpu_custom_call.1} parent=23 // pred_check
        %p230 = pneg %p56
      $region26: #{tpu_custom_call.1} parent=23 // pred_check_branch
        %232 = sbr.rel (%p230) target = $region28
      $region27: #{tpu_custom_call.1} parent=23 // pred_region
        %s233 = smul.u32 4, %s12
      $region28: #{tpu_custom_call.1} parent=23 // pred_fallthru
        _
    $region24: #{tpu_custom_call.1} parent=5 // pred_fallthru
      _
    %p234 = scmp.le.s32.totalorder 2, %s7
    // Predicated region
    $region29: #{tpu_custom_call.1} parent=5 // pred_check
      %p235 = pneg %p234
    $region30: #{tpu_custom_call.1} parent=5 // pred_check_branch
      %237 = sbr.rel (%p235) target = $region32
    $region31: #{tpu_custom_call.1} parent=5 // pred_region
      %s238 = ssub.s32 %s7, 2
      // Predicated region
      $region33: #{tpu_custom_call.1} parent=31 // pred_check
        %p239 = pneg %p62
      $region34: #{tpu_custom_call.1} parent=31 // pred_check_branch
        %241 = sbr.rel (%p239) target = $region36
      $region35: #{tpu_custom_call.1} parent=31 // pred_region
        %s242 = smul.u32 4, %s13
        %p243 = scmp.lt.s32.totalorder %s242, 15
        %s244 = scalar_select %p243, %s242, 15
        %s245 = smul.addr %s244, 8
        %s246 = scalar_lea.vmem %s1, %s245
      $region36: #{tpu_custom_call.1} parent=31 // pred_fallthru
        _
    $region32: #{tpu_custom_call.1} parent=5 // pred_fallthru
      _
  $region6: #{tpu_custom_call.1} parent=0 // loop_footer
    %s11 = sadd.s32 1, %s7
  $region7: #{tpu_custom_call.1} parent=0 // loop_footer_branch
    %6 = sbr.rel target = $region3
  $region8: #{tpu_custom_call.1} parent=0 // loop_exit
    _

</llo_original>
